<compile_context>
chip_gen: v7x
topology: tpu7x:2x2x1
jax: 0.10.0
libtpu: 0.0.40
codegen_flags: <defaults>
</compile_context>

<pallas_src>
import functools

import jax
import jax.numpy as jnp
from jax import lax
from jax.experimental import pallas as pl
from jax.experimental.pallas import tpu as pltpu


# ---------------------------------------------------------------------------
# Kernels
# ---------------------------------------------------------------------------

def _pw_conv_bn_kernel(x_ref, w_ref, s_ref, b_ref, o_ref, *, relu):
    """1x1 conv (as matmul) + BN (scale/bias) + optional ReLU.

    x_ref: (1, Cin, T)   w_ref: (Cout, Cin)   s_ref/b_ref: (Cout, 1)
    o_ref: (1, Cout, T)   — lane axis is the spatial (H*W) tile T.
    """
    acc = jnp.dot(w_ref[...], x_ref[0], preferred_element_type=jnp.float32)
    acc = acc * s_ref[...] + b_ref[...]
    if relu:
        acc = jnp.maximum(acc, 0.0)
    o_ref[0] = acc.astype(o_ref.dtype)


def _pw_conv_bn_res_relu_kernel(x_ref, w_ref, s_ref, b_ref, r_ref, o_ref):
    """1x1 conv + BN + residual add + ReLU (stride-1 Bottleneck tail)."""
    acc = jnp.dot(w_ref[...], x_ref[0], preferred_element_type=jnp.float32)
    acc = acc * s_ref[...] + b_ref[...]
    acc = acc + r_ref[0].astype(jnp.float32)
    o_ref[0] = jnp.maximum(acc, 0.0).astype(o_ref.dtype)


def _dw3x3_bn_kernel(x_ref, w_ref, s_ref, b_ref, o_ref, *, relu):
    """3x3 depthwise conv (stride 1 on a pre-padded NHWC tile) + BN + ReLU.

    x_ref: (1, H+2, W+2, C)   w_ref: (3, 3, C)   s_ref/b_ref: (1, C)
    o_ref: (1, H, W, C)       — per-channel weights broadcast along lanes (C).
    Also used for AvgPool2d(3, 2, 1) with w == 1/9, scale == 1, bias == 0.
    """
    H = o_ref.shape[1]
    W = o_ref.shape[2]
    w = w_ref[...].astype(jnp.float32)          # (3, 3, C)
    acc = None
    for ky in range(3):
        for kx in range(3):
            tap = x_ref[0, ky:ky + H, kx:kx + W, :].astype(jnp.float32)
            contrib = tap * w[ky, kx]
            acc = contrib if acc is None else acc + contrib
    acc = acc * s_ref[0].astype(jnp.float32) + b_ref[0].astype(jnp.float32)
    if relu:
        acc = jnp.maximum(acc, 0.0)
    o_ref[0] = acc.astype(o_ref.dtype)


# ---------------------------------------------------------------------------
# Pallas wrappers
# ---------------------------------------------------------------------------

def _pick_hw_tile(hw):
    """Largest lane-dense (multiple-of-128) tile <= 1024 that divides hw."""
    if hw % 128 != 0:
        return hw
    for cand in (1024, 512, 256, 128):
        if hw % cand == 0:
            return cand
    return hw


def pointwise_conv_bn(x_flat, w, scale, bias, *, relu, residual=None):
    """Fused 1x1-conv + BN (+ residual + ReLU) on an (N, Cin, HW) view."""
    N, Cin, HW = x_flat.shape
    Cout = w.shape[0]
    T = _pick_hw_tile(HW)
    grid = (N, HW // T)

    x_map = lambda n, s: (n, 0, s)
    c_map = lambda n, s: (0, 0)
    o_map = lambda n, s: (n, 0, s)

    in_specs = [
        pl.BlockSpec((1, Cin, T), x_map),
        pl.BlockSpec((Cout, Cin), c_map),
        pl.BlockSpec((Cout, 1), c_map),
        pl.BlockSpec((Cout, 1), c_map),
    ]
    inputs = [x_flat, w, scale, bias]

    if residual is not None:
        in_specs.append(pl.BlockSpec((1, Cout, T), o_map))
        inputs.append(residual)
        kern = _pw_conv_bn_res_relu_kernel
    else:
        kern = functools.partial(_pw_conv_bn_kernel, relu=relu)

    return pl.pallas_call(
        kern,
        out_shape=jax.ShapeDtypeStruct((N, Cout, HW), x_flat.dtype),
        grid_spec=pltpu.PrefetchScalarGridSpec(
            num_scalar_prefetch=0,
            grid=grid,
            in_specs=in_specs,
            out_specs=pl.BlockSpec((1, Cout, T), o_map),
        ),
        compiler_params=pltpu.CompilerParams(
            dimension_semantics=("parallel", "parallel"),
            vmem_limit_bytes=32 * 1024 * 1024,
        ),
    )(*inputs)


def depthwise3x3_bn(x_nhwc_padded, w_taps, scale, bias, *, relu):
    """Fused depthwise-3x3 (stride 1) + BN + ReLU on a padded NHWC tensor."""
    N, Hp, Wp, C = x_nhwc_padded.shape
    H, W = Hp - 2, Wp - 2
    return pl.pallas_call(
        functools.partial(_dw3x3_bn_kernel, relu=relu),
        out_shape=jax.ShapeDtypeStruct((N, H, W, C), x_nhwc_padded.dtype),
        grid_spec=pltpu.PrefetchScalarGridSpec(
            num_scalar_prefetch=0,
            grid=(N,),
            in_specs=[
                pl.BlockSpec((1, Hp, Wp, C), lambda n: (n, 0, 0, 0)),
                pl.BlockSpec((3, 3, C), lambda n: (0, 0, 0)),
                pl.BlockSpec((1, C), lambda n: (0, 0)),
                pl.BlockSpec((1, C), lambda n: (0, 0)),
            ],
            out_specs=pl.BlockSpec((1, H, W, C), lambda n: (n, 0, 0, 0)),
        ),
        compiler_params=pltpu.CompilerParams(
            dimension_semantics=("parallel",),
            vmem_limit_bytes=32 * 1024 * 1024,
        ),
    )(x_nhwc_padded, w_taps, scale, bias)


# ---------------------------------------------------------------------------
# Parameter preparation (trace-time folding: BN, grouped->dense, shuffle)
# ---------------------------------------------------------------------------

def _grouped_1x1_to_dense(w2d, groups):
    """(Cout, Cin/groups) grouped 1x1 weight -> dense block-diagonal (Cout, Cin)."""
    cout, cin_g = w2d.shape
    cin = cin_g * groups
    cout_g = cout // groups
    dense = jnp.zeros((cout, cin), w2d.dtype)
    for gi in range(groups):
        dense = dense.at[gi * cout_g:(gi + 1) * cout_g,
                         gi * cin_g:(gi + 1) * cin_g].set(
            w2d[gi * cout_g:(gi + 1) * cout_g])
    return dense


def prepare_params(raw, in_planes, out_planes, groups, eps=1e-5):
    mid = out_planes // 4
    g = 1 if in_planes == 24 else groups

    def bn_fold(params):
        gamma, beta, mean, var = params
        s = gamma / jnp.sqrt(var + eps)
        return s, beta - mean * s

    s1, b1 = bn_fold(raw["bn1"])
    s2, b2 = bn_fold(raw["bn2"])
    s3, b3 = bn_fold(raw["bn3"])

    w1_dense = _grouped_1x1_to_dense(raw["w1"][:, :, 0, 0], g)        # (mid, in)
    w3_dense = _grouped_1x1_to_dense(raw["w3"][:, :, 0, 0], groups)   # (out, mid)

    # Fold ShuffleBlock(groups=g) into conv1's output channels:
    #   shuffled[:, c] == conv1_out[:, perm(c)],  perm(c) = (c % g)*(mid//g) + c//g
    c = jnp.arange(mid)
    perm = (c % g) * (mid // g) + (c // g)
    w1_fused = w1_dense[perm]
    s1_fused = s1[perm]
    b1_fused = b1[perm]

    w2_taps = jnp.transpose(raw["w2"][:, 0], (1, 2, 0))               # (3, 3, mid)

    return dict(
        w1_fused=w1_fused,
        s1_fused=s1_fused.reshape(mid, 1), b1_fused=b1_fused.reshape(mid, 1),
        w2_taps=w2_taps,
        s2=s2.reshape(1, mid), b2=b2.reshape(1, mid),
        w3_dense=w3_dense,
        s3=s3.reshape(out_planes, 1), b3=b3.reshape(out_planes, 1),
    )


# ---------------------------------------------------------------------------
# Bottleneck forward (Pallas kernels + XLA layout glue)
# ---------------------------------------------------------------------------

def bottleneck_forward(x, p, *, stride, groups, in_planes, out_planes):
    N, Cin, H, W = x.shape
    mid = out_planes // 4

    # Stage 1: conv1 (grouped 1x1, channel shuffle pre-folded) + bn1 + relu.
    x_flat = x.reshape(N, Cin, H * W)
    y1 = pointwise_conv_bn(x_flat, p["w1_fused"], p["s1_fused"], p["b1_fused"],
                           relu=True)                      # (N, mid, H*W), shuffled

    # Stage 2: depthwise 3x3 + bn2 + relu (NHWC layout; stride via subsample).
    y1_nhwc = jnp.transpose(y1.reshape(N, mid, H, W), (0, 2, 3, 1))
    y1_pad = jnp.pad(y1_nhwc, ((0, 0), (1, 1), (1, 1), (0, 0)))
    y2 = depthwise3x3_bn(y1_pad, p["w2_taps"], p["s2"], p["b2"], relu=True)
    if stride == 2:
        y2 = y2[:, ::2, ::2, :]
    Ho, Wo = y2.shape[1], y2.shape[2]
    y2_flat = jnp.transpose(y2, (0, 3, 1, 2)).reshape(N, mid, Ho * Wo)

    # Stage 3: conv3 (grouped 1x1) + bn3, then shortcut combine.
    if stride == 1:
        res = x.reshape(N, Cin, H * W)                     # identity shortcut
        out = pointwise_conv_bn(y2_flat, p["w3_dense"], p["s3"], p["b3"],
                                relu=True, residual=res)   # fused add + relu
        return out.reshape(N, out_planes, H, W)
    else:
        main = pointwise_conv_bn(y2_flat, p["w3_dense"], p["s3"], p["b3"],
                                 relu=True)                # relu folded (distributes over cat)
        # Shortcut: AvgPool2d(3, stride=2, pad=1) == depthwise conv with 1/9 taps.
        x_nhwc = jnp.transpose(x, (0, 2, 3, 1))
        x_pad = jnp.pad(x_nhwc, ((0, 0), (1, 1), (1, 1), (0, 0)))
        pool_w = jnp.full((3, 3, Cin), 1.0 / 9.0, x.dtype)
        ones = jnp.ones((1, Cin), x.dtype)
        zeros = jnp.zeros((1, Cin), x.dtype)
        res = depthwise3x3_bn(x_pad, pool_w, ones, zeros, relu=True)
        res = res[:, ::2, ::2, :]
        res_flat = jnp.transpose(res, (0, 3, 1, 2)).reshape(N, Cin, Ho * Wo)
        out = jnp.concatenate([main, res_flat], axis=1)
        return out.reshape(N, out_planes + Cin, Ho, Wo)


# ---------------------------------------------------------------------------
# Pure-JAX reference (mirrors the PyTorch module, eval-mode BN)
# ---------------------------------------------------------------------------

def _conv_ref(x, w, stride, padding, fcg):
    return lax.conv_general_dilated(
        x, w, window_strides=(stride, stride), padding=padding,
        feature_group_count=fcg,
        dimension_numbers=("NCHW", "OIHW", "NCHW"),
        precision=lax.Precision.HIGHEST)


def bottleneck_reference(x, raw, *, stride, groups, in_planes, out_planes, eps=1e-5):
    mid = out_planes // 4
    g = 1 if in_planes == 24 else groups

    def bn(y, params):
        gamma, beta, mean, var = params
        s = gamma / jnp.sqrt(var + eps)
        b = beta - mean * s
        return y * s.reshape(1, -1, 1, 1) + b.reshape(1, -1, 1, 1)

    out = jax.nn.relu(bn(_conv_ref(x, raw["w1"], 1, "VALID", g), raw["bn1"]))
    N, C, H, W = out.shape
    out = out.reshape(N, g, C // g, H, W).transpose(0, 2, 1, 3, 4).reshape(N, C, H, W)
    out = jax.nn.relu(bn(_conv_ref(out, raw["w2"], stride, ((1, 1), (1, 1)), mid),
                         raw["bn2"]))
    out = bn(_conv_ref(out, raw["w3"], 1, "VALID", groups), raw["bn3"])
    if stride == 2:
        s = lax.reduce_window(x, 0.0, lax.add, (1, 1, 3, 3), (1, 1, 2, 2),
                              ((0, 0), (0, 0), (1, 1), (1, 1)))
        res = s / 9.0
        return jax.nn.relu(jnp.concatenate([out, res], axis=1))
    return jax.nn.relu(out + x)


# ---------------------------------------------------------------------------
# Test
# ---------------------------------------------------------------------------

if __name__ == "__main__":
    root = jax.random.PRNGKey(0)
    N, H, W = 2, 16, 16
    configs = [
        # (in_planes, out_planes, stride, groups)
        (32, 32, 1, 2),   # stride-1 block: identity shortcut, add + relu
        (16, 32, 2, 2),   # stride-2 block: avg-pool shortcut, concat + relu
    ]

    for idx, (in_p, out_p, stride, groups) in enumerate(configs):
        root, sub = jax.random.split(root)
        ks = jax.random.split(sub, 16)
        mid = out_p // 4
        g = 1 if in_p == 24 else groups

        def bn_params(k0, k1, k2, k3, c):
            return (jax.random.uniform(k0, (c,), jnp.float32, 0.5, 1.5),
                    0.1 * jax.random.normal(k1, (c,), jnp.float32),
                    0.1 * jax.random.normal(k2, (c,), jnp.float32),
                    jax.random.uniform(k3, (c,), jnp.float32, 0.5, 1.5))

        raw = {
            "w1": 0.3 * jax.random.normal(ks[0], (mid, in_p // g, 1, 1), jnp.float32),
            "bn1": bn_params(ks[1], ks[2], ks[3], ks[4], mid),
            "w2": 0.3 * jax.random.normal(ks[5], (mid, 1, 3, 3), jnp.float32),
            "bn2": bn_params(ks[6], ks[7], ks[8], ks[9], mid),
            "w3": 0.3 * jax.random.normal(ks[10], (out_p, mid // groups, 1, 1), jnp.float32),
            "bn3": bn_params(ks[11], ks[12], ks[13], ks[14], out_p),
        }
        x = jax.random.normal(ks[15], (N, in_p, H, W), jnp.float32)

        params = prepare_params(raw, in_p, out_p, groups)
        out = bottleneck_forward(x, params, stride=stride, groups=groups,
                                 in_planes=in_p, out_planes=out_p)
        out = jax.block_until_ready(out)

        ref = bottleneck_reference(x, raw, stride=stride, groups=groups,
                                   in_planes=in_p, out_planes=out_p)
        assert out.shape == ref.shape, (out.shape, ref.shape)
        err = float(jnp.max(jnp.abs(out - ref)))
        assert err < 2e-2, f"config {idx}: max abs err {err}"

    print("KERNEL_OK")
</pallas_src>

<mosaic_0001>
module attributes {stable_mosaic.version = 11 : i64} {
  func.func @_pw_conv_bn_kernel(%arg0: i32, %arg1: i32, %arg2: memref<1x32x256xf32, #tpu.memory_space<vmem>>, %arg3: memref<8x32xf32, #tpu.memory_space<vmem>>, %arg4: memref<8x1xf32, #tpu.memory_space<vmem>>, %arg5: memref<8x1xf32, #tpu.memory_space<vmem>>, %arg6: memref<1x8x256xf32, #tpu.memory_space<vmem>>) attributes {dimension_semantics = [#tpu.dimension_semantics<parallel>, #tpu.dimension_semantics<parallel>], iteration_bounds = array<i64: 2, 1>, scalar_prefetch = 0 : i64, scratch_operands = 0 : i64, tpu.core_type = #tpu.core_type<tc>, window_params = [{transform_indices = @transform_0, window_bounds = array<i64: 1, 32, 256>}, {pipeline_mode = #tpu.pipeline_mode<synchronous>, transform_indices = @transform_1, window_bounds = array<i64: 8, 32>}, {pipeline_mode = #tpu.pipeline_mode<synchronous>, transform_indices = @transform_2, window_bounds = array<i64: 8, 1>}, {pipeline_mode = #tpu.pipeline_mode<synchronous>, transform_indices = @transform_3, window_bounds = array<i64: 8, 1>}, {transform_indices = @transform_4, window_bounds = array<i64: 1, 8, 256>}]} {
    %c0 = arith.constant 0 : index
    %c0_0 = arith.constant 0 : index
    %0 = vector.load %arg3[%c0, %c0_0] : memref<8x32xf32, #tpu.memory_space<vmem>>, vector<8x32xf32>
    %c0_1 = arith.constant 0 : index
    %c0_2 = arith.constant 0 : index
    %c0_3 = arith.constant 0 : index
    %1 = vector.load %arg2[%c0_1, %c0_2, %c0_3] : memref<1x32x256xf32, #tpu.memory_space<vmem>>, vector<1x32x256xf32>
    %2 = vector.shape_cast %1 : vector<1x32x256xf32> to vector<32x256xf32>
    %cst = arith.constant dense<0.000000e+00> : vector<8x256xf32>
    %3 = tpu.matmul %0, %2, %cst {dimension_numbers = #tpu.dot_dimension_numbers<[1], [0], [0], [1], [0, 0, 1, 1], [], []>} : vector<8x32xf32>, vector<32x256xf32>, vector<8x256xf32> -> vector<8x256xf32>
    %c0_4 = arith.constant 0 : index
    %c0_5 = arith.constant 0 : index
    %4 = vector.load %arg4[%c0_4, %c0_5] : memref<8x1xf32, #tpu.memory_space<vmem>>, vector<8x1xf32>
    %5 = vector.broadcast %4 : vector<8x1xf32> to vector<8x256xf32>
    %6 = arith.mulf %3, %5 : vector<8x256xf32>
    %c0_6 = arith.constant 0 : index
    %c0_7 = arith.constant 0 : index
    %7 = vector.load %arg5[%c0_6, %c0_7] : memref<8x1xf32, #tpu.memory_space<vmem>>, vector<8x1xf32>
    %8 = vector.broadcast %7 : vector<8x1xf32> to vector<8x256xf32>
    %9 = arith.addf %6, %8 : vector<8x256xf32>
    %cst_8 = arith.constant 0.000000e+00 : f32
    %10 = vector.broadcast %cst_8 : f32 to vector<8x256xf32>
    %11 = arith.maximumf %9, %10 : vector<8x256xf32>
    %c0_9 = arith.constant 0 : index
    %c0_10 = arith.constant 0 : index
    %c0_11 = arith.constant 0 : index
    %12 = vector.load %arg6[%c0_9, %c0_10, %c0_11] : memref<1x8x256xf32, #tpu.memory_space<vmem>>, vector<1x8x256xf32>
    %13 = vector.shape_cast %12 : vector<1x8x256xf32> to vector<8x256xf32>
    %14 = vector.shape_cast %11 : vector<8x256xf32> to vector<1x8x256xf32>
    tpu.vector_store %arg6[%c0_9, %c0_10, %c0_11], %14 {strides = array<i32>} : memref<1x8x256xf32, #tpu.memory_space<vmem>>, vector<1x8x256xf32>,
    return
  }
  func.func @transform_0(%arg0: i32, %arg1: i32) -> (i32, i32, i32) {
    %c0_i32 = arith.constant 0 : i32
    %c0_i32_0 = arith.constant 0 : i32
    return %arg0, %c0_i32, %arg1 : i32, i32, i32
  }
  func.func @transform_1(%arg0: i32, %arg1: i32) -> (i32, i32) {
    %c0_i32 = arith.constant 0 : i32
    %c0_i32_0 = arith.constant 0 : i32
    %c0_i32_1 = arith.constant 0 : i32
    return %c0_i32, %c0_i32_0 : i32, i32
  }
  func.func @transform_2(%arg0: i32, %arg1: i32) -> (i32, i32) {
    %c0_i32 = arith.constant 0 : i32
    %c0_i32_0 = arith.constant 0 : i32
    %c0_i32_1 = arith.constant 0 : i32
    return %c0_i32, %c0_i32_0 : i32, i32
  }
  func.func @transform_3(%arg0: i32, %arg1: i32) -> (i32, i32) {
    %c0_i32 = arith.constant 0 : i32
    %c0_i32_0 = arith.constant 0 : i32
    %c0_i32_1 = arith.constant 0 : i32
    return %c0_i32, %c0_i32_0 : i32, i32
  }
  func.func @transform_4(%arg0: i32, %arg1: i32) -> (i32, i32, i32) {
    %c0_i32 = arith.constant 0 : i32
    %c0_i32_0 = arith.constant 0 : i32
    return %arg0, %c0_i32, %arg1 : i32, i32, i32
  }
}

</mosaic_0001>

<llo_original>
// kernel: tpu_custom_call.1
$region0: #{tpu_custom_call.1}
  #allocation0 [shape = 'u32[]', space=smem, size = 0x4, offset = 0x4, fixed_abs, tag = 'smem constant byte address 0x4 - core index']
  #allocation1 [shape = 'u32[144,128]{1,0:T(1,128)}', space=vmem, size = 0x12000, scoped, tag = 'internal scratch']
  %s0 = inlined_call_operand.hbm [shape: f32[2,32,256], index: 0, kind: input, shape index: {}]
  %s1 = inlined_call_operand.vmem [shape: f32[8,32], index: 1, kind: input, shape index: {}]
  %s2 = inlined_call_operand.vmem [shape: f32[8,1], index: 2, kind: input, shape index: {}]
  %s3 = inlined_call_operand.vmem [shape: f32[8,1], index: 3, kind: input, shape index: {}]
  %s4 = inlined_call_operand.hbm [shape: f32[2,8,256], index: 4, kind: output, shape index: {}]
  %s5 = sld [smem:[#allocation0]]
  $region53: #{tpu_custom_call.1} parent=0
    _
  %s7 = ssub.s32 1, %s5
  %s8 = scalar_select 0, %s7, %s5
  $region1: #{tpu_custom_call.1} parent=0
    #allocation2 [shape = 'u8[65536]{0}', space=vmem, size = 0x10000, scoped, tag = 'input window, operand 0']
    #allocation3 [shape = 's32[2]{0}', space=sflag, size = 0x8, scoped, tag = 'scoped memory for tpu_custom_call.1']
    #allocation4 [shape = 's32[2]{0}', space=sflag, size = 0x8, scoped, tag = 'scoped memory for tpu_custom_call.1']
    #allocation5 [shape = 'u8[16384]{0}', space=vmem, size = 0x4000, scoped, tag = 'output window, operand 0']
    %9 = vsyncpa [#allocation3], 0
    %s10 = scalar_lea.sflag [#allocation3], 1
    %11 = vsyncpa %s10, 0
    %12 = vsyncpa [#allocation4], 0
    %s13 = scalar_lea.sflag [#allocation4], 1
    %14 = vsyncpa %s13, 0
    loop: start=0, step=1, limit=4
    $region2: #{tpu_custom_call.1} parent=1 // loop_pre_header
      _
    $region3: #{tpu_custom_call.1} parent=1 // loop_header
      %s16 = sphi 0, %s20
      %p17 = scmp.ge.s32.totalorder %s16, 4
      %s23 = sphi 0, %s35
      %s24 = sphi 0, %s31
      %s25 = sphi 0, %s23
      %s26 = sphi 0, %s24
      %s27 = sphi 0, %s25
      %s28 = sphi 0, %s26
      %s40 = sphi 0, %s42
      %s43 = sphi 0, %s40
      %s44 = sphi 0, %s43
      %s60 = sphi 0, %s44
      %s64 = sphi 0, %s64
      %s66 = sphi 0, %s64
      %s67 = sphi 0, %s66
      %s81 = sphi 0, %s67
      %s85 = sphi 0, %s85
      %s87 = sphi 0, %s85
      %s88 = sphi 0, %s87
      %s102 = sphi 0, %s88
      %s106 = sphi 0, %s106
      %s108 = sphi 0, %s106
      %s109 = sphi 0, %s108
      %s123 = sphi 0, %s109
      %s131 = sphi 0, %s133
      %s134 = sphi 0, %s131
      %s135 = sphi 0, %s134
      %s151 = sphi 0, %s135
    $region4: #{tpu_custom_call.1} parent=1 // loop_header_branch
      %19 = sbr.rel (%p17) target = $region8
    $region5: #{tpu_custom_call.1} parent=1 // loop_body
      %s21 = ssub.s32 %s16, 1
      %s22 = ssub.s32 %s16, 2
      %s29 = sadd.s32 1, %s24
      %p30 = scmp.ge.s32.totalorder %s29, 1
      %s31 = scalar_select %p30, 0, %s29
      %s32 = sadd.s32 1, %s23
      %s33 = scalar_select %p30, %s32, %s23
      %p34 = scmp.ge.s32.totalorder %s33, 2
      %s35 = scalar_select %p34, 0, %s33
      %s36 = ssub.s32 %s23, %s35
      %s37 = ssub.s32 %s24, %s31
      %s38 = sor.u32 %s36, %s37
      %p39 = scmp.eq.s32.totalorder %s38, 0
      %s41 = sadd.s32 %s40, 1
      %s42 = scalar_select %p39, %s40, %s41
      %p45 = pneg %p39
      %p46 = scmp.eq.s32.totalorder %s16, 1
      %p47 = por %p45, %p46
      %p48 = scmp.ne.s32.totalorder %s40, %s43
      %p49 = scmp.eq.s32.totalorder %s16, 0
      %p50 = por %p48, %p49
      %p51 = scmp.ne.s32.totalorder %s40, %s43
      %p52 = scmp.eq.s32.totalorder %s21, 1
      %p53 = por %p51, %p52
      %p54 = scmp.ne.s32.totalorder %s43, %s44
      %p55 = scmp.eq.s32.totalorder %s21, 0
      %p56 = por %p54, %p55
      %p57 = scmp.ne.s32.totalorder %s43, %s44
      %p58 = scmp.eq.s32.totalorder %s22, 1
      %p59 = por %p57, %p58
      %p61 = scmp.ne.s32.totalorder %s44, %s60
      %p62 = scmp.eq.s32.totalorder %s22, 0
      %p63 = por %p61, %p62
      %s65 = sadd.s32 %s64, 1
      %p68 = scmp.eq.s32.totalorder %s16, 1
      %p69 = scmp.ne.s32.totalorder %s64, %s66
      %p70 = scmp.eq.s32.totalorder %s16, 0
      %p71 = por %p69, %p70
      %p72 = scmp.ne.s32.totalorder %s64, %s66
      %p73 = scmp.eq.s32.totalorder %s21, 1
      %p74 = por %p72, %p73
      %p75 = scmp.ne.s32.totalorder %s66, %s67
      %p76 = scmp.eq.s32.totalorder %s21, 0
      %p77 = por %p75, %p76
      %p78 = scmp.ne.s32.totalorder %s66, %s67
      %p79 = scmp.eq.s32.totalorder %s22, 1
      %p80 = por %p78, %p79
      %p82 = scmp.ne.s32.totalorder %s67, %s81
      %p83 = scmp.eq.s32.totalorder %s22, 0
      %p84 = por %p82, %p83
      %s86 = sadd.s32 %s85, 1
      %p89 = scmp.eq.s32.totalorder %s16, 1
      %p90 = scmp.ne.s32.totalorder %s85, %s87
      %p91 = scmp.eq.s32.totalorder %s16, 0
      %p92 = por %p90, %p91
      %p93 = scmp.ne.s32.totalorder %s85, %s87
      %p94 = scmp.eq.s32.totalorder %s21, 1
      %p95 = por %p93, %p94
      %p96 = scmp.ne.s32.totalorder %s87, %s88
      %p97 = scmp.eq.s32.totalorder %s21, 0
      %p98 = por %p96, %p97
      %p99 = scmp.ne.s32.totalorder %s87, %s88
      %p100 = scmp.eq.s32.totalorder %s22, 1
      %p101 = por %p99, %p100
      %p103 = scmp.ne.s32.totalorder %s88, %s102
      %p104 = scmp.eq.s32.totalorder %s22, 0
      %p105 = por %p103, %p104
      %s107 = sadd.s32 %s106, 1
      %p110 = scmp.eq.s32.totalorder %s16, 1
      %p111 = scmp.ne.s32.totalorder %s106, %s108
      %p112 = scmp.eq.s32.totalorder %s16, 0
      %p113 = por %p111, %p112
      %p114 = scmp.ne.s32.totalorder %s106, %s108
      %p115 = scmp.eq.s32.totalorder %s21, 1
      %p116 = por %p114, %p115
      %p117 = scmp.ne.s32.totalorder %s108, %s109
      %p118 = scmp.eq.s32.totalorder %s21, 0
      %p119 = por %p117, %p118
      %p120 = scmp.ne.s32.totalorder %s108, %s109
      %p121 = scmp.eq.s32.totalorder %s22, 1
      %p122 = por %p120, %p121
      %p124 = scmp.ne.s32.totalorder %s109, %s123
      %p125 = scmp.eq.s32.totalorder %s22, 0
      %p126 = por %p124, %p125
      %s127 = ssub.s32 %s23, %s35
      %s128 = ssub.s32 %s24, %s31
      %s129 = sor.u32 %s127, %s128
      %p130 = scmp.eq.s32.totalorder %s129, 0
      %s132 = sadd.s32 %s131, 1
      %s133 = scalar_select %p130, %s131, %s132
      %p136 = pneg %p130
      %p137 = scmp.eq.s32.totalorder %s16, 1
      %p138 = por %p136, %p137
      %p139 = scmp.ne.s32.totalorder %s131, %s134
      %p140 = scmp.eq.s32.totalorder %s16, 0
      %p141 = por %p139, %p140
      %p142 = scmp.ne.s32.totalorder %s131, %s134
      %p143 = scmp.eq.s32.totalorder %s21, 1
      %p144 = por %p142, %p143
      %p145 = scmp.ne.s32.totalorder %s134, %s135
      %p146 = scmp.eq.s32.totalorder %s21, 0
      %p147 = por %p145, %p146
      %p148 = scmp.ne.s32.totalorder %s134, %s135
      %p149 = scmp.eq.s32.totalorder %s22, 1
      %p150 = por %p148, %p149
      %p152 = scmp.ne.s32.totalorder %s135, %s151
      %p153 = scmp.eq.s32.totalorder %s22, 0
      %p154 = por %p152, %p153
      %p155 = scmp.le.s32.totalorder 1, %s16
      %p156 = scmp.lt.s32.totalorder %s16, 3
      %p157 = pnand %p155, %p156
      %p158 = pneg %p157
      // Predicated region
      $region9: #{tpu_custom_call.1} parent=5 // pred_check
        _
      $region10: #{tpu_custom_call.1} parent=5 // pred_check_branch
        %160 = sbr.rel (%p157) target = $region12
      $region11: #{tpu_custom_call.1} parent=5 // pred_region
        %s161 = ssub.s32 %s16, 1
        // Predicated region
        $region13: #{tpu_custom_call.1} parent=11 // pred_check
          %p162 = pneg %p77
        $region14: #{tpu_custom_call.1} parent=11 // pred_check_branch
          %164 = sbr.rel (%p162) target = $region16
        $region15: #{tpu_custom_call.1} parent=11 // pred_region
          _
        $region16: #{tpu_custom_call.1} parent=11 // pred_fallthru
          _
        // Predicated region
        $region17: #{tpu_custom_call.1} parent=11 // pred_check
          %p165 = pneg %p98
        $region18: #{tpu_custom_call.1} parent=11 // pred_check_branch
          %167 = sbr.rel (%p165) target = $region20
        $region19: #{tpu_custom_call.1} parent=11 // pred_region
          _
        $region20: #{tpu_custom_call.1} parent=11 // pred_fallthru
          _
        // Predicated region
        $region21: #{tpu_custom_call.1} parent=11 // pred_check
          %p168 = pneg %p119
        $region22: #{tpu_custom_call.1} parent=11 // pred_check_branch
          %170 = sbr.rel (%p168) target = $region24
        $region23: #{tpu_custom_call.1} parent=11 // pred_region
          _
        $region24: #{tpu_custom_call.1} parent=11 // pred_fallthru
          _
      $region12: #{tpu_custom_call.1} parent=5 // pred_fallthru
        _
      %p171 = scmp.lt.s32.totalorder %s16, 2
      // Predicated region
      $region25: #{tpu_custom_call.1} parent=5 // pred_check
        %p172 = pneg %p171
      $region26: #{tpu_custom_call.1} parent=5 // pred_check_branch
        %174 = sbr.rel (%p172) target = $region28
      $region27: #{tpu_custom_call.1} parent=5 // pred_region
        // Predicated region
        $region29: #{tpu_custom_call.1} parent=27 // pred_check
          %p175 = pneg %p50
        $region30: #{tpu_custom_call.1} parent=27 // pred_check_branch
          %177 = sbr.rel (%p175) target = $region32
        $region31: #{tpu_custom_call.1} parent=27 // pred_region
          %s178 = sand.u32 %s40, 1
          %s179 = scalar_lea.sflag [#allocation3], %s178
          %s180 = sand.u32 %s40, 1
          %s181 = smul.addr %s180, 64
          %s182 = scalar_lea.vmem [#allocation2], %s181
          %s183 = smul.u32 2, %s24
          %s185 = ssub.s32 1024, 1024
          %186 = vsyncadd %s179, %s185
          %s187 = smul.addr %s23, 8
          %s188 = sadd.s32 %s183, %s187
          %s189 = smul.addr %s188, 128
          %s190 = scalar_lea.hbm %s0, %s189
          %s191 = sshll.u32 %s182, 4
          %s192 = int_to_ptr.vmem [resolvable:$true] %s191
          %197 = dma.hbm_to_vmem [thread:$0]  %s190, 1024, %s192, %s179, 256, 256, 16
        $region32: #{tpu_custom_call.1} parent=27 // pred_fallthru
          _
      $region28: #{tpu_custom_call.1} parent=5 // pred_fallthru
        _
      %p198 = scmp.le.s32.totalorder 1, %s16
      %p199 = scmp.lt.s32.totalorder %s16, 3
      %p200 = pnand %p198, %p199
      %p201 = pneg %p200
      // Predicated region
      $region33: #{tpu_custom_call.1} parent=5 // pred_check
        _
      $region34: #{tpu_custom_call.1} parent=5 // pred_check_branch
        %203 = sbr.rel (%p200) target = $region36
      $region35: #{tpu_custom_call.1} parent=5 // pred_region
        %s204 = ssub.s32 %s16, 1
        %s205 = sand.u32 %s43, 1
        %s206 = scalar_lea.sflag [#allocation3], %s205
        %s207 = sand.u32 %s43, 1
        %s208 = smul.addr %s207, 64
        %s209 = scalar_lea.vmem [#allocation2], %s208
        // Predicated region
        $region37: #{tpu_custom_call.1} parent=35 // pred_check
          %p210 = pneg %p56
        $region38: #{tpu_custom_call.1} parent=35 // pred_check_branch
          %212 = sbr.rel (%p210) target = $region40
        $region39: #{tpu_custom_call.1} parent=35 // pred_region
          %213 = dma.done %s206, 1024
        $region40: #{tpu_custom_call.1} parent=35 // pred_fallthru
          _
        %s214 = sand.u32 %s43, 1
        %s215 = scalar_lea.sflag [#allocation3], %s214
        %s216 = sand.u32 %s43, 1
        %s217 = smul.addr %s216, 64
        %s218 = scalar_lea.vmem [#allocation2], %s217
        %p219 = pneg %p56
        %p220 = pneg %p53
        %p221 = pneg %p77
        %p222 = pneg %p74
        %p223 = pneg %p98
        %p224 = pneg %p95
        %p225 = pneg %p119
        %p226 = pneg %p116
        %p227 = pneg %p147
        %p228 = pneg %p144
        %s229 = sand.u32 %s134, 1
        %s230 = scalar_lea.sflag [#allocation4], %s229
        %s231 = sand.u32 %s134, 1
        %s232 = smul.addr %s231, 16
        %s233 = scalar_lea.vmem [#allocation5], %s232
        %s234 = smul.u32 2, %s26
        %s235 = smul.u32 2, %s26
        %v236 = vld [vmem:[%s1] sm:$0xff]
        %v237 = vld [vmem:[%s209] sm:$0xff]
        %v238 = vld [vmem:[%s209 + $0x8] sm:$0xff]
        %v239 = vld [vmem:[%s209 + $0x10] sm:$0xff]
        %v240 = vld [vmem:[%s209 + $0x18] sm:$0xff]
        %v241 = vld [vmem:[%s209 + $0x20] sm:$0xff]
        %v242 = vld [vmem:[%s209 + $0x28] sm:$0xff]
        %v243 = vld [vmem:[%s209 + $0x30] sm:$0xff]
        %v244 = vld [vmem:[%s209 + $0x38] sm:$0xff]
        %vm245 = vcmask 261120
        %v247 = vsel %vm245, %v236, 0
        %249 = vmatprep.subr.mxu0 %v238
        %250 = vmatpush1.msra.mxu0 %v237
        %251 = vmatprep.subr.mxu0 %v240
        %252 = vmatpush1.msra.mxu0 %v239
        %253 = vmatprep.subr.mxu0 %v242
        %254 = vmatpush1.msra.mxu0 %v241
        %255 = vmatprep.subr.mxu0 %v244
        %256 = vmatpush1.msra.mxu0 %v243
        %257 = vmatprep.subr.mxu0 0.0
        %258 = vmatpush1.msra.mxu0 0.0
        %259 = vmatprep.subr.mxu0 0.0
        %260 = vmatpush1.msra.mxu0 0.0
        %261 = vmatprep.subr.mxu0 0.0
        %262 = vmatpush1.msra.mxu0 0.0
        %263 = vmatprep.subr.mxu0 0.0
        %264 = vmatpush1.msra.mxu0 0.0
        %265 = vmatprep.subr.mxu0 0.0
        %266 = vmatpush1.msra.mxu0 0.0
        %267 = vmatprep.subr.mxu0 0.0
        %268 = vmatpush1.msra.mxu0 0.0
        %269 = vmatprep.subr.mxu0 0.0
        %270 = vmatpush1.msra.mxu0 0.0
        %271 = vmatprep.subr.mxu0 0.0
        %272 = vmatpush1.msra.mxu0 0.0
        %273 = vmatprep.subr.mxu0 0.0
        %274 = vmatpush1.msra.mxu0 0.0
        %275 = vmatprep.subr.mxu0 0.0
        %276 = vmatpush1.msra.mxu0 0.0
        %277 = vmatprep.subr.mxu0 0.0
        %278 = vmatpush1.msra.mxu0 0.0
        %279 = vmatprep.subr.mxu0 0.0
        %280 = vmatpush1.msra.mxu0 0.0
        %281 = vmatprep.subr.mxu0 0.0
        %282 = vmatpush1.msra.mxu0 0.0
        %283 = vmatprep.subr.mxu0 0.0
        %284 = vmatpush1.msra.mxu0 0.0
        %285 = vmatprep.subr.mxu0 0.0
        %286 = vmatpush1.msra.mxu0 0.0
        %287 = vmatprep.subr.mxu0 0.0
        %288 = vmatpush1.msra.mxu0 0.0
        %289 = vmatprep.subr.mxu0 0.0
        %290 = vmatpush1.msra.mxu0 0.0
        %291 = vmatprep.subr.mxu0 0.0
        %292 = vmatpush1.msra.mxu0 0.0
        %293 = vmatprep.subr.mxu0 0.0
        %294 = vmatpush1.msra.mxu0 0.0
        %295 = vmatprep.subr.mxu0 0.0
        %296 = vmatpush1.msra.mxu0 0.0
        %297 = vmatprep.subr.mxu0 0.0
        %298 = vmatpush1.msra.mxu0 0.0
        %299 = vmatprep.subr.mxu0 0.0
        %300 = vmatpush1.msra.mxu0 0.0
        %301 = vmatprep.subr.mxu0 0.0
        %302 = vmatpush1.msra.mxu0 0.0
        %303 = vmatprep.subr.mxu0 0.0
        %304 = vmatpush1.msra.mxu0 0.0
        %305 = vmatprep.subr.mxu0 0.0
        %306 = vmatpush1.msra.mxu0 0.0
        %307 = vmatprep.subr.mxu0 0.0
        %308 = vmatpush1.msra.mxu0 0.0
        %309 = vmatprep.subr.mxu0 0.0
        %310 = vmatpush1.msra.mxu0 0.0
        %311 = vmatprep.subr.mxu0 0.0
        %312 = vmatpush1.msra.mxu0 0.0
        %313 = vmatprep.mubr.f32.mxu0 0.0
        %314 = vmatmul.mubr.f32.gmra.mrb[0].mxu0 %v247
        %v315 = vpop.f32.mrb[0].mxu0
        %v316 = vadd.f32 0.0, %v315
        %v317 = vpop.f32.mrb[0].mxu0
        %v318 = vadd.f32 0.0, %v317
        %319 = vdwg.mxu0
        %v320 = vld [vmem:[%s2] sm:$0xff]
        %322 = vset.pattern.permute.xlu0 0
        %323 = vperm.xlu0 %322, %v320
        %v324 = vpop.permute.xlu0 %323
        %v326 = vmul.f32 %v316, %v324
        %v327 = vmul.f32 %v318, %v324
        %v328 = vld [vmem:[%s3] sm:$0xff]
        %330 = vset.pattern.permute.xlu0 0
        %331 = vperm.xlu0 %330, %v328
        %v332 = vpop.permute.xlu0 %331
        %v334 = vadd.f32 %v326, %v332
        %v335 = vadd.f32 %v327, %v332
        %v336 = vmax.f32 %v334, 0.0
        %v337 = vmax.f32 %v335, 0.0
        %338 = vst [vmem:[%s233] sm:$0xff] %v336
        %339 = vst [vmem:[%s233 + $0x8] sm:$0xff] %v337
        %s340 = sand.u32 %s134, 1
        %s341 = scalar_lea.sflag [#allocation4], %s340
        %s342 = sand.u32 %s134, 1
        %s343 = smul.addr %s342, 16
        %s344 = scalar_lea.vmem [#allocation5], %s343
        // Predicated region
        $region41: #{tpu_custom_call.1} parent=35 // pred_check
          %p345 = pneg %p144
        $region42: #{tpu_custom_call.1} parent=35 // pred_check_branch
          %347 = sbr.rel (%p345) target = $region44
        $region43: #{tpu_custom_call.1} parent=35 // pred_region
          %s348 = smul.u32 2, %s26
          %s350 = ssub.s32 256, 256
          %351 = vsyncadd %s341, %s350
          %s352 = smul.addr %s25, 2
          %s353 = sadd.s32 %s348, %s352
          %s354 = smul.addr %s353, 128
          %s355 = scalar_lea.hbm %s4, %s354
          %s357 = sshll.u32 %s344, 4
          %s358 = int_to_ptr.vmem [resolvable:$true] %s357
          %360 = dma.vmem_to_hbm [thread:$0]  %s358, 256, %s355, %s341
        $region44: #{tpu_custom_call.1} parent=35 // pred_fallthru
          _
      $region36: #{tpu_custom_call.1} parent=5 // pred_fallthru
        _
      %p361 = scmp.le.s32.totalorder 2, %s16
      // Predicated region
      $region45: #{tpu_custom_call.1} parent=5 // pred_check
        %p362 = pneg %p361
      $region46: #{tpu_custom_call.1} parent=5 // pred_check_branch
        %364 = sbr.rel (%p362) target = $region48
      $region47: #{tpu_custom_call.1} parent=5 // pred_region
        %s365 = ssub.s32 %s16, 2
        // Predicated region
        $region49: #{tpu_custom_call.1} parent=47 // pred_check
          %p366 = pneg %p150
        $region50: #{tpu_custom_call.1} parent=47 // pred_check_branch
          %368 = sbr.rel (%p366) target = $region52
        $region51: #{tpu_custom_call.1} parent=47 // pred_region
          %s369 = sand.u32 %s135, 1
          %s370 = scalar_lea.sflag [#allocation4], %s369
          %s371 = sand.u32 %s135, 1
          %s372 = smul.addr %s371, 16
          %s373 = scalar_lea.vmem [#allocation5], %s372
          %374 = dma.done %s370, 256
        $region52: #{tpu_custom_call.1} parent=47 // pred_fallthru
          _
      $region48: #{tpu_custom_call.1} parent=5 // pred_fallthru
        _
    $region6: #{tpu_custom_call.1} parent=1 // loop_footer
      %s20 = sadd.s32 1, %s16
    $region7: #{tpu_custom_call.1} parent=1 // loop_footer_branch
      %15 = sbr.rel target = $region3
    $region8: #{tpu_custom_call.1} parent=1 // loop_exit
      _
    %375 = vsyncpa [#allocation3], 1
    %s376 = scalar_lea.sflag [#allocation3], 1
    %377 = vsyncpa %s376, 1
    %378 = vsyncpa [#allocation4], 1
    %s379 = scalar_lea.sflag [#allocation4], 1
    %380 = vsyncpa %s379, 1

</llo_original>
